<compile_context>
chip_gen: v5e
topology: v5e:2x2
jax: 0.10.0
libtpu: 0.0.40
codegen_flags: <defaults>
</compile_context>

<pallas_src>
import math
import functools

import jax
import jax.numpy as jnp
from jax.experimental import pallas as pl
from jax.experimental.pallas import tpu as pltpu


def mha_batch_kernel(x_ref, wqkv_ref, bqkv_ref, wo_ref, bo_ref, o_ref, *,
                     num_heads, scale, compute_dtype, exact_softmax):
    _, S, D = x_ref.shape
    d_k = D // num_heads

    # Cast x in-kernel (cheap VPU pass hidden under the pipeline); avoids a separate
    # XLA cast op that would re-read x from HBM before the kernel starts.
    x = x_ref[0].astype(compute_dtype)                                      # [S, D]

    # Fused QKV projection: one full-width MXU matmul (K = D, N = 3D), f32 accumulation,
    # packed f32 bias add.
    qkv = jnp.dot(x, wqkv_ref[...],
                  preferred_element_type=jnp.float32) + bqkv_ref[...]       # [S, 3D] f32

    # Fold 1/sqrt(d_k) into q ([S, D]) instead of scaling the [H, S, S] score tensor.
    q = qkv[:, :D] * scale
    k = qkv[:, D:2 * D]
    v = qkv[:, 2 * D:]

    def split_heads(t):                                                     # [S, D] -> [H, S, d_k]
        return jnp.transpose(t.reshape(S, num_heads, d_k), (1, 0, 2))

    qh = split_heads(q).astype(compute_dtype)
    kh = split_heads(k).astype(compute_dtype)
    vh = split_heads(v).astype(compute_dtype)

    # Batched-over-heads attention: single dot_general per step (no per-head Python
    # loop, no per-head lane slicing, no concatenate).
    scores = jnp.einsum('hqd,hkd->hqk', qh, kh,
                        preferred_element_type=jnp.float32)                 # [H, S, S] f32

    # Numerically-stable softmax in f32.  Normalization is applied to ctx ([H, S, d_k])
    # rather than to the [H, S, S] probabilities to cut VPU multiplies.
    scores = scores - jnp.max(scores, axis=-1, keepdims=True)
    p = jnp.exp(scores)
    denom = jnp.sum(p, axis=-1, keepdims=True)                              # [H, S, 1] f32

    ctx = jnp.einsum('hqk,hkd->hqd', p.astype(compute_dtype), vh,
                     preferred_element_type=jnp.float32)                    # [H, S, d_k] f32
    if exact_softmax:
        ctx = ctx / denom
    else:
        ctx = ctx * pl.reciprocal(denom, approx=True)                       # EUP slot (~1e-3 rel err)

    # combine_heads: [H, S, d_k] -> [S, D]; each head lands in its lane slice, so the
    # output projection is a single full-K (= D) matmul.
    ctx2d = jnp.transpose(ctx, (1, 0, 2)).reshape(S, D).astype(compute_dtype)

    out = jnp.dot(ctx2d, wo_ref[...],
                  preferred_element_type=jnp.float32) + bo_ref[...]         # [S, D] f32
    o_ref[0] = out.astype(o_ref.dtype)


def prepare_mha_params(w_qkv, b_qkv, w_out, b_out, *, compute_dtype=jnp.bfloat16):
    """One-time parameter relayout, hoisted out of the per-call path.

    Weights use [in, out] layout: w_qkv [D, 3D], w_out [D, D]; biases [3D] / [D].
    """
    return dict(
        w_qkv=jnp.asarray(w_qkv, compute_dtype),                 # [D, 3D]
        b_qkv=jnp.asarray(b_qkv, jnp.float32).reshape(1, -1),    # [1, 3D] packed q|k|v bias slab
        w_out=jnp.asarray(w_out, compute_dtype),                 # [D, D]
        b_out=jnp.asarray(b_out, jnp.float32).reshape(1, -1),    # [1, D]
    )


def _vmem_limit_bytes():
    """Generation-aware scoped-VMEM budget: ~75% of physical capacity
    (128 MiB on v5e/v6e -> 96 MiB, 64 MiB on v7x -> 48 MiB); conservative fallback."""
    cap = None
    try:
        info_fn = getattr(pltpu, "get_tpu_info", None)
        if info_fn is not None:
            cap = getattr(info_fn(), "vmem_capacity_bytes", None)
    except Exception:
        cap = None
    if not cap:
        return 48 * 1024 * 1024
    return int(cap) * 3 // 4


def multi_head_attention(x, params, *, num_heads, compute_dtype=jnp.bfloat16,
                         exact_softmax=False):
    """x: [B, S, D] (float); params from prepare_mha_params(). Returns [B, S, D]."""
    B, S, D = x.shape
    assert D % num_heads == 0, "d_model must be divisible by num_heads"
    d_k = D // num_heads
    scale = 1.0 / math.sqrt(d_k)

    w_qkv, b_qkv = params["w_qkv"], params["b_qkv"]
    w_out, b_out = params["w_out"], params["b_out"]
    assert w_qkv.shape == (D, 3 * D) and w_out.shape == (D, D)

    kernel = functools.partial(mha_batch_kernel, num_heads=num_heads, scale=scale,
                               compute_dtype=compute_dtype, exact_softmax=exact_softmax)

    return pl.pallas_call(
        kernel,
        out_shape=jax.ShapeDtypeStruct((B, S, D), x.dtype),
        grid_spec=pltpu.PrefetchScalarGridSpec(
            num_scalar_prefetch=0,
            grid=(B,),                                               # one step per batch element
            in_specs=[
                pl.BlockSpec((1, S, D), lambda b: (b, 0, 0)),        # x[b]
                # Constant index_maps -> fetched from HBM once, VMEM-resident across B.
                pl.BlockSpec((D, 3 * D), lambda b: (0, 0)),          # W_qkv (full, resident)
                pl.BlockSpec((1, 3 * D), lambda b: (0, 0)),          # packed q|k|v bias
                pl.BlockSpec((D, D), lambda b: (0, 0)),              # W_out (full, resident)
                pl.BlockSpec((1, D), lambda b: (0, 0)),              # b_out
            ],
            out_specs=pl.BlockSpec((1, S, D), lambda b: (b, 0, 0)),
        ),
        compiler_params=pltpu.CompilerParams(
            dimension_semantics=("parallel",),                       # megacore / v7x 2-TC split over B
            vmem_limit_bytes=_vmem_limit_bytes(),
        ),
    )(x, w_qkv, b_qkv, w_out, b_out)


def _xavier_uniform(key, out_features, in_features, dtype=jnp.float32):
    # matches torch.nn.init.xavier_uniform_ on a [out, in] Linear weight
    bound = math.sqrt(6.0 / (in_features + out_features))
    return jax.random.uniform(key, (out_features, in_features),
                              minval=-bound, maxval=bound, dtype=dtype)


def reference_mha(x, w_qkv, b_qkv, w_out, b_out, num_heads):
    B, S, D = x.shape
    d_k = D // num_heads
    qkv = x @ w_qkv + b_qkv
    q, k, v = jnp.split(qkv, 3, axis=-1)

    def split(t):
        return t.reshape(B, S, num_heads, d_k).transpose(0, 2, 1, 3)

    q, k, v = split(q), split(k), split(v)
    scores = jnp.einsum('bhqd,bhkd->bhqk', q, k) / math.sqrt(d_k)
    w = jax.nn.softmax(scores, axis=-1)
    ctx = jnp.einsum('bhqk,bhkd->bhqd', w, v)
    ctx = ctx.transpose(0, 2, 1, 3).reshape(B, S, D)
    return ctx @ w_out + b_out


if __name__ == "__main__":
    B, S, d_model, num_heads = 2, 8, 32, 4

    key = jax.random.PRNGKey(0)
    k_x, k_wqkv, k_wout = jax.random.split(key, 3)

    # Deterministic parameter init (mirrors the module's _reset_parameters).
    w_qkv_t = _xavier_uniform(k_wqkv, 3 * d_model, d_model)   # torch layout [3D, D]
    w_out_t = _xavier_uniform(k_wout, d_model, d_model)       # torch layout [D, D]
    b_qkv = jnp.zeros((3 * d_model,), jnp.float32)
    b_out = jnp.zeros((d_model,), jnp.float32)

    # Kernel expects [in, out] weights.
    w_qkv = w_qkv_t.T
    w_out = w_out_t.T

    x = jax.random.normal(k_x, (B, S, d_model), dtype=jnp.float32)

    # One-time parameter prep (hoisted relayout/cast), then the fused kernel call.
    params = prepare_mha_params(w_qkv, b_qkv, w_out, b_out)
    out = multi_head_attention(x, params, num_heads=num_heads)
    out = jax.block_until_ready(out)

    ref = reference_mha(x, w_qkv, b_qkv, w_out, b_out, num_heads)
    assert out.shape == (B, S, d_model)
    # bf16 MXU operands with f32 accumulation (+ approx softmax reciprocal) -> compare
    # to the f32 reference with a bf16-appropriate tolerance.
    assert jnp.allclose(out, ref, atol=5e-2, rtol=5e-2), "mismatch vs reference"

    print("KERNEL_OK")
</pallas_src>

<mosaic_0001>
module attributes {stable_mosaic.version = 11 : i64} {
  func.func @mha_batch_kernel(%arg0: i32, %arg1: memref<1x8x32xf32, #tpu.memory_space<vmem>>, %arg2: memref<32x96xbf16, #tpu.memory_space<vmem>>, %arg3: memref<1x96xf32, #tpu.memory_space<vmem>>, %arg4: memref<32x32xbf16, #tpu.memory_space<vmem>>, %arg5: memref<1x32xf32, #tpu.memory_space<vmem>>, %arg6: memref<1x8x32xf32, #tpu.memory_space<vmem>>) attributes {dimension_semantics = [#tpu.dimension_semantics<parallel>], iteration_bounds = array<i64: 2>, scalar_prefetch = 0 : i64, scratch_operands = 0 : i64, tpu.core_type = #tpu.core_type<tc>, window_params = [{transform_indices = @transform_0, window_bounds = array<i64: 1, 8, 32>}, {pipeline_mode = #tpu.pipeline_mode<synchronous>, transform_indices = @transform_1, window_bounds = array<i64: 32, 96>}, {pipeline_mode = #tpu.pipeline_mode<synchronous>, transform_indices = @transform_2, window_bounds = array<i64: 1, 96>}, {pipeline_mode = #tpu.pipeline_mode<synchronous>, transform_indices = @transform_3, window_bounds = array<i64: 32, 32>}, {pipeline_mode = #tpu.pipeline_mode<synchronous>, transform_indices = @transform_4, window_bounds = array<i64: 1, 32>}, {transform_indices = @transform_5, window_bounds = array<i64: 1, 8, 32>}]} {
    %c0 = arith.constant 0 : index
    %c0_0 = arith.constant 0 : index
    %c0_1 = arith.constant 0 : index
    %0 = vector.load %arg1[%c0, %c0_0, %c0_1] : memref<1x8x32xf32, #tpu.memory_space<vmem>>, vector<1x8x32xf32>
    %1 = vector.shape_cast %0 : vector<1x8x32xf32> to vector<8x32xf32>
    %2 = arith.truncf %1 : vector<8x32xf32> to vector<8x32xbf16>
    %c0_2 = arith.constant 0 : index
    %c0_3 = arith.constant 0 : index
    %3 = vector.load %arg2[%c0_2, %c0_3] : memref<32x96xbf16, #tpu.memory_space<vmem>>, vector<32x96xbf16>
    %cst = arith.constant dense<0.000000e+00> : vector<8x96xf32>
    %4 = tpu.matmul %2, %3, %cst {dimension_numbers = #tpu.dot_dimension_numbers<[1], [0], [0], [1], [0, 0, 1, 1], [], []>} : vector<8x32xbf16>, vector<32x96xbf16>, vector<8x96xf32> -> vector<8x96xf32>
    %c0_4 = arith.constant 0 : index
    %c0_5 = arith.constant 0 : index
    %5 = vector.load %arg3[%c0_4, %c0_5] : memref<1x96xf32, #tpu.memory_space<vmem>>, vector<1x96xf32>
    %6 = vector.broadcast %5 : vector<1x96xf32> to vector<8x96xf32>
    %7 = arith.addf %4, %6 : vector<8x96xf32>
    %8 = vector.extract_strided_slice %7 {offsets = [0, 0], sizes = [8, 32], strides = [1, 1]} : vector<8x96xf32> to vector<8x32xf32>
    %cst_6 = arith.constant 0.353553385 : f32
    %9 = vector.broadcast %cst_6 : f32 to vector<8x32xf32>
    %10 = arith.mulf %8, %9 : vector<8x32xf32>
    %11 = vector.extract_strided_slice %7 {offsets = [0, 32], sizes = [8, 32], strides = [1, 1]} : vector<8x96xf32> to vector<8x32xf32>
    %12 = vector.extract_strided_slice %7 {offsets = [0, 64], sizes = [8, 32], strides = [1, 1]} : vector<8x96xf32> to vector<8x32xf32>
    %13 = vector.shape_cast %10 : vector<8x32xf32> to vector<8x4x8xf32>
    %14 = tpu.transpose %13, [1, 0, 2] : vector<8x4x8xf32> -> vector<4x8x8xf32>
    %15 = arith.truncf %14 : vector<4x8x8xf32> to vector<4x8x8xbf16>
    %16 = vector.shape_cast %11 : vector<8x32xf32> to vector<8x4x8xf32>
    %17 = tpu.transpose %16, [1, 0, 2] : vector<8x4x8xf32> -> vector<4x8x8xf32>
    %18 = arith.truncf %17 : vector<4x8x8xf32> to vector<4x8x8xbf16>
    %19 = vector.shape_cast %12 : vector<8x32xf32> to vector<8x4x8xf32>
    %20 = tpu.transpose %19, [1, 0, 2] : vector<8x4x8xf32> -> vector<4x8x8xf32>
    %21 = arith.truncf %20 : vector<4x8x8xf32> to vector<4x8x8xbf16>
    "tpu.trace_start"() <{level = 10 : i32, message = "hqd,hkd->hqk"}> : () -> ()
    %cst_7 = arith.constant dense<0.000000e+00> : vector<4x8x8xf32>
    %22 = tpu.matmul %15, %18, %cst_7 {dimension_numbers = #tpu.dot_dimension_numbers<[2], [2], [1], [1], [0, 0, 0, 1, 1, 1], [0], [0]>} : vector<4x8x8xbf16>, vector<4x8x8xbf16>, vector<4x8x8xf32> -> vector<4x8x8xf32>
    "tpu.trace_stop"() : () -> ()
    %cst_8 = arith.constant dense<0xFF800000> : vector<4x8xf32>
    %23 = vector.multi_reduction <maximumf>, %22, %cst_8 [2] : vector<4x8x8xf32> to vector<4x8xf32>
    %24 = vector.shape_cast %23 : vector<4x8xf32> to vector<4x8x1xf32>
    %25 = vector.broadcast %24 : vector<4x8x1xf32> to vector<4x8x8xf32>
    %26 = arith.subf %22, %25 : vector<4x8x8xf32>
    %27 = math.exp %26 : vector<4x8x8xf32>
    %cst_9 = arith.constant dense<0.000000e+00> : vector<4x8xf32>
    %28 = vector.multi_reduction <add>, %27, %cst_9 [2] : vector<4x8x8xf32> to vector<4x8xf32>
    %29 = vector.shape_cast %28 : vector<4x8xf32> to vector<4x8x1xf32>
    %30 = arith.truncf %27 : vector<4x8x8xf32> to vector<4x8x8xbf16>
    "tpu.trace_start"() <{level = 10 : i32, message = "hqk,hkd->hqd"}> : () -> ()
    %cst_10 = arith.constant dense<0.000000e+00> : vector<4x8x8xf32>
    %31 = tpu.matmul %30, %21, %cst_10 {dimension_numbers = #tpu.dot_dimension_numbers<[2], [1], [1], [2], [0, 0, 0, 1, 1, 2], [0], [0]>} : vector<4x8x8xbf16>, vector<4x8x8xbf16>, vector<4x8x8xf32> -> vector<4x8x8xf32>
    "tpu.trace_stop"() : () -> ()
    %32 = tpu.reciprocal %29 {approx = true} : vector<4x8x1xf32> -> vector<4x8x1xf32>
    %33 = vector.broadcast %32 : vector<4x8x1xf32> to vector<4x8x8xf32>
    %34 = arith.mulf %31, %33 : vector<4x8x8xf32>
    %35 = tpu.transpose %34, [1, 0, 2] : vector<4x8x8xf32> -> vector<8x4x8xf32>
    %36 = vector.shape_cast %35 : vector<8x4x8xf32> to vector<8x32xf32>
    %37 = arith.truncf %36 : vector<8x32xf32> to vector<8x32xbf16>
    %c0_11 = arith.constant 0 : index
    %c0_12 = arith.constant 0 : index
    %38 = vector.load %arg4[%c0_11, %c0_12] : memref<32x32xbf16, #tpu.memory_space<vmem>>, vector<32x32xbf16>
    %cst_13 = arith.constant dense<0.000000e+00> : vector<8x32xf32>
    %39 = tpu.matmul %37, %38, %cst_13 {dimension_numbers = #tpu.dot_dimension_numbers<[1], [0], [0], [1], [0, 0, 1, 1], [], []>} : vector<8x32xbf16>, vector<32x32xbf16>, vector<8x32xf32> -> vector<8x32xf32>
    %c0_14 = arith.constant 0 : index
    %c0_15 = arith.constant 0 : index
    %40 = vector.load %arg5[%c0_14, %c0_15] : memref<1x32xf32, #tpu.memory_space<vmem>>, vector<1x32xf32>
    %41 = vector.broadcast %40 : vector<1x32xf32> to vector<8x32xf32>
    %42 = arith.addf %39, %41 : vector<8x32xf32>
    %c0_16 = arith.constant 0 : index
    %c0_17 = arith.constant 0 : index
    %c0_18 = arith.constant 0 : index
    %43 = vector.load %arg6[%c0_16, %c0_17, %c0_18] : memref<1x8x32xf32, #tpu.memory_space<vmem>>, vector<1x8x32xf32>
    %44 = vector.shape_cast %43 : vector<1x8x32xf32> to vector<8x32xf32>
    %45 = vector.shape_cast %42 : vector<8x32xf32> to vector<1x8x32xf32>
    tpu.vector_store %arg6[%c0_16, %c0_17, %c0_18], %45 {strides = array<i32>} : memref<1x8x32xf32, #tpu.memory_space<vmem>>, vector<1x8x32xf32>,
    return
  }
  func.func @transform_0(%arg0: i32) -> (i32, i32, i32) {
    %c0_i32 = arith.constant 0 : i32
    %c0_i32_0 = arith.constant 0 : i32
    %c0_i32_1 = arith.constant 0 : i32
    return %arg0, %c0_i32, %c0_i32_0 : i32, i32, i32
  }
  func.func @transform_1(%arg0: i32) -> (i32, i32) {
    %c0_i32 = arith.constant 0 : i32
    %c0_i32_0 = arith.constant 0 : i32
    %c0_i32_1 = arith.constant 0 : i32
    return %c0_i32, %c0_i32_0 : i32, i32
  }
  func.func @transform_2(%arg0: i32) -> (i32, i32) {
    %c0_i32 = arith.constant 0 : i32
    %c0_i32_0 = arith.constant 0 : i32
    %c0_i32_1 = arith.constant 0 : i32
    return %c0_i32, %c0_i32_0 : i32, i32
  }
  func.func @transform_3(%arg0: i32) -> (i32, i32) {
    %c0_i32 = arith.constant 0 : i32
    %c0_i32_0 = arith.constant 0 : i32
    %c0_i32_1 = arith.constant 0 : i32
    return %c0_i32, %c0_i32_0 : i32, i32
  }
  func.func @transform_4(%arg0: i32) -> (i32, i32) {
    %c0_i32 = arith.constant 0 : i32
    %c0_i32_0 = arith.constant 0 : i32
    %c0_i32_1 = arith.constant 0 : i32
    return %c0_i32, %c0_i32_0 : i32, i32
  }
  func.func @transform_5(%arg0: i32) -> (i32, i32, i32) {
    %c0_i32 = arith.constant 0 : i32
    %c0_i32_0 = arith.constant 0 : i32
    %c0_i32_1 = arith.constant 0 : i32
    return %arg0, %c0_i32, %c0_i32_0 : i32, i32, i32
  }
}

</mosaic_0001>

<llo_original>
// kernel: tpu_custom_call.1
$region0: #{tpu_custom_call.1}
  #allocation0 [shape = 'u32[]', space=smem, size = 0x4, offset = 0x4, fixed_abs, tag = 'smem constant byte address 0x4 - core index']
  #allocation1 [shape = 'u32[72,128]{1,0:T(1,128)}', space=vmem, size = 0x9000, scoped, tag = 'internal scratch']
  %s0 = inlined_call_operand.hbm [shape: f32[2,8,32], index: 0, kind: input, shape index: {}]
  %s1 = inlined_call_operand.hbm [shape: bf16[32,96], index: 1, kind: input, shape index: {}]
  %s2 = inlined_call_operand.vmem [shape: f32[1,96], index: 2, kind: input, shape index: {}]
  %s3 = inlined_call_operand.hbm [shape: bf16[32,32], index: 3, kind: input, shape index: {}]
  %s4 = inlined_call_operand.vmem [shape: f32[1,32], index: 4, kind: input, shape index: {}]
  %s5 = inlined_call_operand.hbm [shape: f32[2,8,32], index: 5, kind: output, shape index: {}]
  %s6 = sld [smem:[#allocation0]]
  $region65: #{tpu_custom_call.1} parent=0
    _
  %s8 = ssub.s32 1, %s6
  %s9 = scalar_select 0, %s8, %s6
  $region1: #{tpu_custom_call.1} parent=0
    #allocation2 [shape = 'u8[8192]{0}', space=vmem, size = 0x2000, scoped, tag = 'input window, operand 0']
    #allocation3 [shape = 's32[2]{0}', space=sflag, size = 0x8, scoped, tag = 'scoped memory for tpu_custom_call.1']
    #allocation4 [shape = 's32[2]{0}', space=sflag, size = 0x8, scoped, tag = 'scoped memory for tpu_custom_call.1']
    #allocation5 [shape = 'u8[8192]{0}', space=vmem, size = 0x2000, scoped, tag = 'input window, operand 1, single buffered']
    #allocation6 [shape = 's32[1]{0}', space=sflag, size = 0x4, scoped, tag = 'scoped memory for tpu_custom_call.1']
    #allocation7 [shape = 'u8[8192]{0}', space=vmem, size = 0x2000, scoped, tag = 'input window, operand 3, single buffered']
    #allocation8 [shape = 'u8[8192]{0}', space=vmem, size = 0x2000, scoped, tag = 'output window, operand 0']
    %10 = vsyncpa [#allocation3], 0
    %s11 = scalar_lea.sflag [#allocation3], 1
    %12 = vsyncpa %s11, 0
    %13 = vsyncpa [#allocation6], 0
    %14 = vsyncpa [#allocation4], 0
    %s15 = scalar_lea.sflag [#allocation4], 1
    %16 = vsyncpa %s15, 0
    loop: start=0, step=1, limit=4
    $region2: #{tpu_custom_call.1} parent=1 // loop_pre_header
      _
    $region3: #{tpu_custom_call.1} parent=1 // loop_header
      %s18 = sphi 0, %s22
      %p19 = scmp.ge.s32.totalorder %s18, 4
      %s28 = sphi 0, %s30
      %s31 = sphi 0, %s28
      %s32 = sphi 0, %s31
      %s48 = sphi 0, %s32
      %s52 = sphi 0, %s52
      %s54 = sphi 0, %s52
      %s55 = sphi 0, %s54
      %s69 = sphi 0, %s55
      %s73 = sphi 0, %s73
      %s75 = sphi 0, %s73
      %s76 = sphi 0, %s75
      %s90 = sphi 0, %s76
      %s94 = sphi 0, %s94
      %s96 = sphi 0, %s94
      %s97 = sphi 0, %s96
      %s111 = sphi 0, %s97
      %s115 = sphi 0, %s115
      %s117 = sphi 0, %s115
      %s118 = sphi 0, %s117
      %s132 = sphi 0, %s118
      %s138 = sphi 0, %s140
      %s141 = sphi 0, %s138
      %s142 = sphi 0, %s141
      %s158 = sphi 0, %s142
    $region4: #{tpu_custom_call.1} parent=1 // loop_header_branch
      %21 = sbr.rel (%p19) target = $region8
    $region5: #{tpu_custom_call.1} parent=1 // loop_body
      %s23 = ssub.s32 %s18, 1
      %s24 = ssub.s32 %s18, 2
      %s25 = sadd.s32 %s18, 1
      %s26 = ssub.s32 %s18, %s25
      %p27 = scmp.eq.s32.totalorder %s26, 0
      %s29 = sadd.s32 %s28, 1
      %s30 = scalar_select %p27, %s28, %s29
      %p33 = pneg %p27
      %p34 = scmp.eq.s32.totalorder %s18, 1
      %p35 = por %p33, %p34
      %p36 = scmp.ne.s32.totalorder %s28, %s31
      %p37 = scmp.eq.s32.totalorder %s18, 0
      %p38 = por %p36, %p37
      %p39 = scmp.ne.s32.totalorder %s28, %s31
      %p40 = scmp.eq.s32.totalorder %s23, 1
      %p41 = por %p39, %p40
      %p42 = scmp.ne.s32.totalorder %s31, %s32
      %p43 = scmp.eq.s32.totalorder %s23, 0
      %p44 = por %p42, %p43
      %p45 = scmp.ne.s32.totalorder %s31, %s32
      %p46 = scmp.eq.s32.totalorder %s24, 1
      %p47 = por %p45, %p46
      %p49 = scmp.ne.s32.totalorder %s32, %s48
      %p50 = scmp.eq.s32.totalorder %s24, 0
      %p51 = por %p49, %p50
      %s53 = sadd.s32 %s52, 1
      %p56 = scmp.eq.s32.totalorder %s18, 1
      %p57 = scmp.ne.s32.totalorder %s52, %s54
      %p58 = scmp.eq.s32.totalorder %s18, 0
      %p59 = por %p57, %p58
      %p60 = scmp.ne.s32.totalorder %s52, %s54
      %p61 = scmp.eq.s32.totalorder %s23, 1
      %p62 = por %p60, %p61
      %p63 = scmp.ne.s32.totalorder %s54, %s55
      %p64 = scmp.eq.s32.totalorder %s23, 0
      %p65 = por %p63, %p64
      %p66 = scmp.ne.s32.totalorder %s54, %s55
      %p67 = scmp.eq.s32.totalorder %s24, 1
      %p68 = por %p66, %p67
      %p70 = scmp.ne.s32.totalorder %s55, %s69
      %p71 = scmp.eq.s32.totalorder %s24, 0
      %p72 = por %p70, %p71
      %s74 = sadd.s32 %s73, 1
      %p77 = scmp.eq.s32.totalorder %s18, 1
      %p78 = scmp.ne.s32.totalorder %s73, %s75
      %p79 = scmp.eq.s32.totalorder %s18, 0
      %p80 = por %p78, %p79
      %p81 = scmp.ne.s32.totalorder %s73, %s75
      %p82 = scmp.eq.s32.totalorder %s23, 1
      %p83 = por %p81, %p82
      %p84 = scmp.ne.s32.totalorder %s75, %s76
      %p85 = scmp.eq.s32.totalorder %s23, 0
      %p86 = por %p84, %p85
      %p87 = scmp.ne.s32.totalorder %s75, %s76
      %p88 = scmp.eq.s32.totalorder %s24, 1
      %p89 = por %p87, %p88
      %p91 = scmp.ne.s32.totalorder %s76, %s90
      %p92 = scmp.eq.s32.totalorder %s24, 0
      %p93 = por %p91, %p92
      %s95 = sadd.s32 %s94, 1
      %p98 = scmp.eq.s32.totalorder %s18, 1
      %p99 = scmp.ne.s32.totalorder %s94, %s96
      %p100 = scmp.eq.s32.totalorder %s18, 0
      %p101 = por %p99, %p100
      %p102 = scmp.ne.s32.totalorder %s94, %s96
      %p103 = scmp.eq.s32.totalorder %s23, 1
      %p104 = por %p102, %p103
      %p105 = scmp.ne.s32.totalorder %s96, %s97
      %p106 = scmp.eq.s32.totalorder %s23, 0
      %p107 = por %p105, %p106
      %p108 = scmp.ne.s32.totalorder %s96, %s97
      %p109 = scmp.eq.s32.totalorder %s24, 1
      %p110 = por %p108, %p109
      %p112 = scmp.ne.s32.totalorder %s97, %s111
      %p113 = scmp.eq.s32.totalorder %s24, 0
      %p114 = por %p112, %p113
      %s116 = sadd.s32 %s115, 1
      %p119 = scmp.eq.s32.totalorder %s18, 1
      %p120 = scmp.ne.s32.totalorder %s115, %s117
      %p121 = scmp.eq.s32.totalorder %s18, 0
      %p122 = por %p120, %p121
      %p123 = scmp.ne.s32.totalorder %s115, %s117
      %p124 = scmp.eq.s32.totalorder %s23, 1
      %p125 = por %p123, %p124
      %p126 = scmp.ne.s32.totalorder %s117, %s118
      %p127 = scmp.eq.s32.totalorder %s23, 0
      %p128 = por %p126, %p127
      %p129 = scmp.ne.s32.totalorder %s117, %s118
      %p130 = scmp.eq.s32.totalorder %s24, 1
      %p131 = por %p129, %p130
      %p133 = scmp.ne.s32.totalorder %s118, %s132
      %p134 = scmp.eq.s32.totalorder %s24, 0
      %p135 = por %p133, %p134
      %s136 = ssub.s32 %s18, %s25
      %p137 = scmp.eq.s32.totalorder %s136, 0
      %s139 = sadd.s32 %s138, 1
      %s140 = scalar_select %p137, %s138, %s139
      %p143 = pneg %p137
      %p144 = scmp.eq.s32.totalorder %s18, 1
      %p145 = por %p143, %p144
      %p146 = scmp.ne.s32.totalorder %s138, %s141
      %p147 = scmp.eq.s32.totalorder %s18, 0
      %p148 = por %p146, %p147
      %p149 = scmp.ne.s32.totalorder %s138, %s141
      %p150 = scmp.eq.s32.totalorder %s23, 1
      %p151 = por %p149, %p150
      %p152 = scmp.ne.s32.totalorder %s141, %s142
      %p153 = scmp.eq.s32.totalorder %s23, 0
      %p154 = por %p152, %p153
      %p155 = scmp.ne.s32.totalorder %s141, %s142
      %p156 = scmp.eq.s32.totalorder %s24, 1
      %p157 = por %p155, %p156
      %p159 = scmp.ne.s32.totalorder %s142, %s158
      %p160 = scmp.eq.s32.totalorder %s24, 0
      %p161 = por %p159, %p160
      %p162 = scmp.le.s32.totalorder 1, %s18
      %p163 = scmp.lt.s32.totalorder %s18, 3
      %p164 = pnand %p162, %p163
      %p165 = pneg %p164
      // Predicated region
      $region9: #{tpu_custom_call.1} parent=5 // pred_check
        _
      $region10: #{tpu_custom_call.1} parent=5 // pred_check_branch
        %167 = sbr.rel (%p164) target = $region12
      $region11: #{tpu_custom_call.1} parent=5 // pred_region
        %s168 = ssub.s32 %s18, 1
        // Predicated region
        $region13: #{tpu_custom_call.1} parent=11 // pred_check
          %p169 = pneg %p65
        $region14: #{tpu_custom_call.1} parent=11 // pred_check_branch
          %171 = sbr.rel (%p169) target = $region16
        $region15: #{tpu_custom_call.1} parent=11 // pred_region
          %173 = vsyncadd [#allocation6], 0
          %s174 = sshll.u32 %s1, 4
          %s175 = int_to_ptr.hbm [resolvable:$true] %s174
          %s176 = sshll.u32 [#allocation5], 4
          %s177 = int_to_ptr.vmem [resolvable:$true] %s176
          %182 = dma.hbm_to_vmem [thread:$0]  %s175, 256, %s177, [#allocation6], 64, 64, 4
        $region16: #{tpu_custom_call.1} parent=11 // pred_fallthru
          _
        // Predicated region
        $region17: #{tpu_custom_call.1} parent=11 // pred_check
          %p183 = pneg %p86
        $region18: #{tpu_custom_call.1} parent=11 // pred_check_branch
          %185 = sbr.rel (%p183) target = $region20
        $region19: #{tpu_custom_call.1} parent=11 // pred_region
          _
        $region20: #{tpu_custom_call.1} parent=11 // pred_fallthru
          _
        // Predicated region
        $region21: #{tpu_custom_call.1} parent=11 // pred_check
          %p186 = pneg %p107
        $region22: #{tpu_custom_call.1} parent=11 // pred_check_branch
          %188 = sbr.rel (%p186) target = $region24
        $region23: #{tpu_custom_call.1} parent=11 // pred_region
          %190 = vsyncadd [#allocation6], 0
          %s191 = sshll.u32 %s3, 4
          %s192 = int_to_ptr.hbm [resolvable:$true] %s191
          %s193 = sshll.u32 [#allocation7], 4
          %s194 = int_to_ptr.vmem [resolvable:$true] %s193
          %199 = dma.hbm_to_vmem [thread:$0]  %s192, 256, %s194, [#allocation6], 64, 64, 4
        $region24: #{tpu_custom_call.1} parent=11 // pred_fallthru
          _
        // Predicated region
        $region25: #{tpu_custom_call.1} parent=11 // pred_check
          %p200 = pneg %p128
        $region26: #{tpu_custom_call.1} parent=11 // pred_check_branch
          %202 = sbr.rel (%p200) target = $region28
        $region27: #{tpu_custom_call.1} parent=11 // pred_region
          _
        $region28: #{tpu_custom_call.1} parent=11 // pred_fallthru
          _
      $region12: #{tpu_custom_call.1} parent=5 // pred_fallthru
        _
      %p203 = scmp.lt.s32.totalorder %s18, 2
      // Predicated region
      $region29: #{tpu_custom_call.1} parent=5 // pred_check
        %p204 = pneg %p203
      $region30: #{tpu_custom_call.1} parent=5 // pred_check_branch
        %206 = sbr.rel (%p204) target = $region32
      $region31: #{tpu_custom_call.1} parent=5 // pred_region
        // Predicated region
        $region33: #{tpu_custom_call.1} parent=31 // pred_check
          %p207 = pneg %p38
        $region34: #{tpu_custom_call.1} parent=31 // pred_check_branch
          %209 = sbr.rel (%p207) target = $region36
        $region35: #{tpu_custom_call.1} parent=31 // pred_region
          %s210 = sand.u32 %s28, 1
          %s211 = scalar_lea.sflag [#allocation3], %s210
          %s212 = sand.u32 %s28, 1
          %s213 = smul.addr %s212, 8
          %s214 = scalar_lea.vmem [#allocation2], %s213
          %216 = vsyncadd %s211, 0
          %s217 = smul.addr %s18, 8
          %s218 = scalar_lea.hbm %s0, %s217
          %s220 = sshll.u32 %s218, 4
          %s221 = int_to_ptr.hbm [resolvable:$true] %s220
          %s222 = sshll.u32 %s214, 4
          %s223 = int_to_ptr.vmem [resolvable:$true] %s222
          %225 = dma.hbm_to_vmem [thread:$0]  %s221, 128, %s223, %s211
        $region36: #{tpu_custom_call.1} parent=31 // pred_fallthru
          _
      $region32: #{tpu_custom_call.1} parent=5 // pred_fallthru
        _
      %p226 = scmp.le.s32.totalorder 1, %s18
      %p227 = scmp.lt.s32.totalorder %s18, 3
      %p228 = pnand %p226, %p227
      %p229 = pneg %p228
      // Predicated region
      $region37: #{tpu_custom_call.1} parent=5 // pred_check
        _
      $region38: #{tpu_custom_call.1} parent=5 // pred_check_branch
        %231 = sbr.rel (%p228) target = $region40
      $region39: #{tpu_custom_call.1} parent=5 // pred_region
        %s232 = ssub.s32 %s18, 1
        %s233 = sand.u32 %s31, 1
        %s234 = scalar_lea.sflag [#allocation3], %s233
        %s235 = sand.u32 %s31, 1
        %s236 = smul.addr %s235, 8
        %s237 = scalar_lea.vmem [#allocation2], %s236
        // Predicated region
        $region41: #{tpu_custom_call.1} parent=39 // pred_check
          %p238 = pneg %p44
        $region42: #{tpu_custom_call.1} parent=39 // pred_check_branch
          %240 = sbr.rel (%p238) target = $region44
        $region43: #{tpu_custom_call.1} parent=39 // pred_region
          %242 = dma.done %s234, 128
        $region44: #{tpu_custom_call.1} parent=39 // pred_fallthru
          _
        // Predicated region
        $region45: #{tpu_custom_call.1} parent=39 // pred_check
          %p243 = pneg %p65
        $region46: #{tpu_custom_call.1} parent=39 // pred_check_branch
          %245 = sbr.rel (%p243) target = $region48
        $region47: #{tpu_custom_call.1} parent=39 // pred_region
          %247 = dma.done [#allocation6], 256
        $region48: #{tpu_custom_call.1} parent=39 // pred_fallthru
          _
        // Predicated region
        $region49: #{tpu_custom_call.1} parent=39 // pred_check
          %p248 = pneg %p107
        $region50: #{tpu_custom_call.1} parent=39 // pred_check_branch
          %250 = sbr.rel (%p248) target = $region52
        $region51: #{tpu_custom_call.1} parent=39 // pred_region
          %252 = dma.done [#allocation6], 256
        $region52: #{tpu_custom_call.1} parent=39 // pred_fallthru
          _
        %s253 = sand.u32 %s31, 1
        %s254 = scalar_lea.sflag [#allocation3], %s253
        %s255 = sand.u32 %s31, 1
        %s256 = smul.addr %s255, 8
        %s257 = scalar_lea.vmem [#allocation2], %s256
        %p258 = pneg %p44
        %p259 = pneg %p41
        %p260 = pneg %p65
        %p261 = pneg %p62
        %p262 = pneg %p86
        %p263 = pneg %p83
        %p264 = pneg %p107
        %p265 = pneg %p104
        %p266 = pneg %p128
        %p267 = pneg %p125
        %p268 = pneg %p154
        %p269 = pneg %p151
        %s270 = sand.u32 %s141, 1
        %s271 = scalar_lea.sflag [#allocation4], %s270
        %s272 = sand.u32 %s141, 1
        %s273 = smul.addr %s272, 8
        %s274 = scalar_lea.vmem [#allocation8], %s273
        %v276 = vld [vmem:[%s237] sm:$0xff]
        %v277 = vpack.c.bf16 %v276, %v276
        %v278 = vld [vmem:[#allocation5] sm:$0xf]
        %v279 = vld [vmem:[#allocation5 + $0x4] sm:$0xf]
        %v280 = vld [vmem:[#allocation5 + $0x8] sm:$0xf]
        %v281 = vld [vmem:[#allocation5 + $0xc] sm:$0xf]
        %v282 = vld [vmem:[%s2] sm:$0x1]
        %v284 = vperm.slane %v282, 0
        %v290 = vunpack.c.l.b16 %v278
        %v291 = vunpack.c.l.b16 %v279
        %v292 = vunpack.c.l.b16 %v280
        %v293 = vunpack.c.l.b16 %v281
        %v294 = vpack.c.b16 %v291, %v290
        %v295 = vpack.c.b16 %v293, %v292
        %vm298 = vcmask 261120
        %v300 = vsel %vm298, %v277, 0
        %302 = vmatpush.bf16.msra.mxu0 0
        %303 = vmatpush.bf16.msra.mxu0 0
        %304 = vmatpush.bf16.msra.mxu0 0
        %305 = vmatpush.bf16.msra.mxu0 0
        %306 = vmatpush.bf16.msra.mxu0 0
        %307 = vmatpush.bf16.msra.mxu0 0
        %308 = vmatpush.bf16.msra.mxu0 %v295
        %309 = vmatpush.bf16.msra.mxu0 %v294
        %310 = vmatmul.bf16.gmra.mxu0 %v300
        %v311 = vpop.f32.mrf.mxu0
        %v312 = vadd.f32 %v284, %v311
        %v313 = vpop.f32.mrf.mxu0
        %314 = vdwg.mxu0
        %v315 = vmul.f32 %v312, 0.35355338
        %317 = vrot.lane.b32.xlu0 %v315, 120
        %v318 = vpop.permute.xlu0 %317
        %320 = vrot.lane.b32.xlu0 %v315, 112
        %v321 = vpop.permute.xlu0 %320
        %323 = vrot.lane.b32.xlu0 %v315, 104
        %v324 = vpop.permute.xlu0 %323
        %v326 = vrot.slane %v321, 4
        %vm327 = vcmask 1047556
        %v328 = vsel %vm327, %v326, %v315
        %v329 = vrot.slane %v315, 4
        %v330 = vsel %vm327, %v321, %v329
        %v332 = vunpack.c.l.s4 1983009808
        %v333 = vunpack.c.0.s8 %v332
        %v334 = vperm.slane %v328, %v333
        %v336 = vunpack.c.l.s4 1983009808
        %v337 = vunpack.c.0.s8 %v336
        %v338 = vperm.slane %v330, %v337
        %v339 = vrot.slane %v324, 4
        %v340 = vsel %vm327, %v339, %v318
        %v341 = vrot.slane %v318, 4
        %v342 = vsel %vm327, %v324, %v341
        %v344 = vunpack.c.l.s4 1983009808
        %v345 = vunpack.c.0.s8 %v344
        %v346 = vperm.slane %v340, %v345
        %v348 = vunpack.c.l.s4 1983009808
        %v349 = vunpack.c.0.s8 %v348
        %v350 = vperm.slane %v342, %v349
        %v351 = vrot.slane %v346, 4
        %v352 = vsel %vm327, %v351, %v334
        %v353 = vrot.slane %v334, 4
        %v354 = vsel %vm327, %v346, %v353
        %v356 = vunpack.c.l.s4 1934713408
        %v357 = vunpack.c.0.s8 %v356
        %v358 = vperm.slane %v352, %v357
        %v360 = vunpack.c.l.s4 1934713408
        %v361 = vunpack.c.0.s8 %v360
        %v362 = vperm.slane %v354, %v361
        %v363 = vrot.slane %v350, 4
        %v364 = vsel %vm327, %v363, %v338
        %v365 = vrot.slane %v338, 4
        %v366 = vsel %vm327, %v350, %v365
        %v368 = vunpack.c.l.s4 1934713408
        %v369 = vunpack.c.0.s8 %v368
        %v370 = vperm.slane %v364, %v369
        %v372 = vunpack.c.l.s4 1934713408
        %v373 = vunpack.c.0.s8 %v372
        %v374 = vperm.slane %v366, %v373
        %v375 = vrot.slane %v358, 4
        %v376 = vsel %vm327, 0.0, %v375
        %v377 = vrot.slane %v362, 4
        %v378 = vsel %vm327, 0.0, %v377
        %v379 = vrot.slane %v370, 4
        %v380 = vsel %vm327, 0.0, %v379
        %v381 = vrot.slane %v374, 4
        %v382 = vsel %vm327, 0.0, %v381
        %v383 = vsel %vm327, %v377, %v358
        %v385 = vunpack.c.l.s4 1983009808
        %v386 = vunpack.c.0.s8 %v385
        %v387 = vperm.slane %v383, %v386
        %v388 = vrot.slane %v378, 4
        %v389 = vsel %vm327, %v388, %v376
        %v391 = vunpack.c.l.s4 1983009808
        %v392 = vunpack.c.0.s8 %v391
        %v393 = vperm.slane %v389, %v392
        %v394 = vsel %vm327, %v381, %v370
        %v396 = vunpack.c.l.s4 1983009808
        %v397 = vunpack.c.0.s8 %v396
        %v398 = vperm.slane %v394, %v397
        %v399 = vrot.slane %v382, 4
        %v400 = vsel %vm327, %v399, %v380
        %v402 = vunpack.c.l.s4 1983009808
        %v403 = vunpack.c.0.s8 %v402
        %v404 = vperm.slane %v400, %v403
        %v405 = vrot.slane %v393, 4
        %v406 = vsel %vm327, %v405, %v387
        %v407 = vrot.slane %v387, 4
        %v408 = vsel %vm327, %v393, %v407
        %v410 = vunpack.c.l.s4 1934713408
        %v411 = vunpack.c.0.s8 %v410
        %v412 = vperm.slane %v406, %v411
        %v414 = vunpack.c.l.s4 1934713408
        %v415 = vunpack.c.0.s8 %v414
        %v416 = vperm.slane %v408, %v415
        %v417 = vrot.slane %v404, 4
        %v418 = vsel %vm327, %v417, %v398
        %v419 = vrot.slane %v398, 4
        %v420 = vsel %vm327, %v404, %v419
        %v422 = vunpack.c.l.s4 1934713408
        %v423 = vunpack.c.0.s8 %v422
        %v424 = vperm.slane %v418, %v423
        %v426 = vunpack.c.l.s4 1934713408
        %v427 = vunpack.c.0.s8 %v426
        %v428 = vperm.slane %v420, %v427
        %v429 = vrot.slane %v424, 4
        %v430 = vsel %vm327, %v429, %v412
        %v431 = vrot.slane %v412, 4
        %v432 = vsel %vm327, %v424, %v431
        %v433 = vrot.slane %v428, 4
        %v434 = vsel %vm327, %v433, %v416
        %v435 = vrot.slane %v416, 4
        %v436 = vsel %vm327, %v428, %v435
        %v437 = vpack.c.bf16 %v430, %v430
        %v438 = vpack.c.bf16 %v432, %v432
        %v439 = vpack.c.bf16 %v434, %v434
        %v440 = vpack.c.bf16 %v436, %v436
        %442 = vrot.lane.b32.xlu0 %v312, 120
        %v443 = vpop.permute.xlu0 %442
        %444 = vrot.lane.b32.xlu0 %v312, 112
        %v445 = vpop.permute.xlu0 %444
        %446 = vrot.lane.b32.xlu0 %v312, 104
        %v447 = vpop.permute.xlu0 %446
        %448 = vrot.lane.b32.xlu0 %v312, 96
        %v449 = vpop.permute.xlu0 %448
        %450 = vrot.lane.b32.xlu0 %v443, 96
        %v451 = vpop.permute.xlu0 %450
        %452 = vrot.lane.b32.xlu0 %v445, 96
        %v453 = vpop.permute.xlu0 %452
        %454 = vrot.lane.b32.xlu0 %v447, 96
        %v455 = vpop.permute.xlu0 %454
        %v460 = vrot.slane %v453, 4
        %v461 = vsel %vm327, %v460, %v449
        %v462 = vrot.slane %v449, 4
        %v463 = vsel %vm327, %v453, %v462
        %v465 = vunpack.c.l.s4 1983009808
        %v466 = vunpack.c.0.s8 %v465
        %v467 = vperm.slane %v461, %v466
        %v469 = vunpack.c.l.s4 1983009808
        %v470 = vunpack.c.0.s8 %v469
        %v471 = vperm.slane %v463, %v470
        %v472 = vrot.slane %v455, 4
        %v473 = vsel %vm327, %v472, %v451
        %v474 = vrot.slane %v451, 4
        %v475 = vsel %vm327, %v455, %v474
        %v477 = vunpack.c.l.s4 1983009808
        %v478 = vunpack.c.0.s8 %v477
        %v479 = vperm.slane %v473, %v478
        %v481 = vunpack.c.l.s4 1983009808
        %v482 = vunpack.c.0.s8 %v481
        %v483 = vperm.slane %v475, %v482
        %v484 = vrot.slane %v479, 4
        %v485 = vsel %vm327, %v484, %v467
        %v486 = vrot.slane %v467, 4
        %v487 = vsel %vm327, %v479, %v486
        %v489 = vunpack.c.l.s4 1934713408
        %v490 = vunpack.c.0.s8 %v489
        %v491 = vperm.slane %v485, %v490
        %v493 = vunpack.c.l.s4 1934713408
        %v494 = vunpack.c.0.s8 %v493
        %v495 = vperm.slane %v487, %v494
        %v496 = vrot.slane %v483, 4
        %v497 = vsel %vm327, %v496, %v471
        %v498 = vrot.slane %v471, 4
        %v499 = vsel %vm327, %v483, %v498
        %v501 = vunpack.c.l.s4 1934713408
        %v502 = vunpack.c.0.s8 %v501
        %v503 = vperm.slane %v497, %v502
        %v505 = vunpack.c.l.s4 1934713408
        %v506 = vunpack.c.0.s8 %v505
        %v507 = vperm.slane %v499, %v506
        %v508 = vrot.slane %v491, 4
        %v509 = vsel %vm327, 0.0, %v508
        %v510 = vrot.slane %v495, 4
        %v511 = vsel %vm327, 0.0, %v510
        %v512 = vrot.slane %v503, 4
        %v513 = vsel %vm327, 0.0, %v512
        %v514 = vrot.slane %v507, 4
        %v515 = vsel %vm327, 0.0, %v514
        %v516 = vsel %vm327, %v510, %v491
        %v518 = vunpack.c.l.s4 1983009808
        %v519 = vunpack.c.0.s8 %v518
        %v520 = vperm.slane %v516, %v519
        %v521 = vrot.slane %v511, 4
        %v522 = vsel %vm327, %v521, %v509
        %v524 = vunpack.c.l.s4 1983009808
        %v525 = vunpack.c.0.s8 %v524
        %v526 = vperm.slane %v522, %v525
        %v527 = vsel %vm327, %v514, %v503
        %v529 = vunpack.c.l.s4 1983009808
        %v530 = vunpack.c.0.s8 %v529
        %v531 = vperm.slane %v527, %v530
        %v532 = vrot.slane %v515, 4
        %v533 = vsel %vm327, %v532, %v513
        %v535 = vunpack.c.l.s4 1983009808
        %v536 = vunpack.c.0.s8 %v535
        %v537 = vperm.slane %v533, %v536
        %v538 = vrot.slane %v526, 4
        %v539 = vsel %vm327, %v538, %v520
        %v540 = vrot.slane %v520, 4
        %v541 = vsel %vm327, %v526, %v540
        %v543 = vunpack.c.l.s4 1934713408
        %v544 = vunpack.c.0.s8 %v543
        %v545 = vperm.slane %v539, %v544
        %v547 = vunpack.c.l.s4 1934713408
        %v548 = vunpack.c.0.s8 %v547
        %v549 = vperm.slane %v541, %v548
        %v550 = vrot.slane %v537, 4
        %v551 = vsel %vm327, %v550, %v531
        %v552 = vrot.slane %v531, 4
        %v553 = vsel %vm327, %v537, %v552
        %v555 = vunpack.c.l.s4 1934713408
        %v556 = vunpack.c.0.s8 %v555
        %v557 = vperm.slane %v551, %v556
        %v559 = vunpack.c.l.s4 1934713408
        %v560 = vunpack.c.0.s8 %v559
        %v561 = vperm.slane %v553, %v560
        %v562 = vrot.slane %v557, 4
        %v563 = vsel %vm327, %v562, %v545
        %v564 = vrot.slane %v545, 4
        %v565 = vsel %vm327, %v557, %v564
        %v566 = vrot.slane %v561, 4
        %v567 = vsel %vm327, %v566, %v549
        %v568 = vrot.slane %v549, 4
        %v569 = vsel %vm327, %v561, %v568
        %v570 = vpack.c.bf16 %v563, %v563
        %v571 = vpack.c.bf16 %v565, %v565
        %v572 = vpack.c.bf16 %v567, %v567
        %v573 = vpack.c.bf16 %v569, %v569
        %574 = vrot.lane.b32.xlu0 %v312, 64
        %v575 = vpop.permute.xlu0 %574
        %576 = vrot.lane.b32.xlu0 %v443, 64
        %v577 = vpop.permute.xlu0 %576
        %578 = vrot.lane.b32.xlu0 %v445, 64
        %v579 = vpop.permute.xlu0 %578
        %580 = vrot.lane.b32.xlu0 %v447, 64
        %v581 = vpop.permute.xlu0 %580
        %v586 = vrot.slane %v579, 4
        %v587 = vsel %vm327, %v586, %v575
        %v588 = vrot.slane %v575, 4
        %v589 = vsel %vm327, %v579, %v588
        %v591 = vunpack.c.l.s4 1983009808
        %v592 = vunpack.c.0.s8 %v591
        %v593 = vperm.slane %v587, %v592
        %v595 = vunpack.c.l.s4 1983009808
        %v596 = vunpack.c.0.s8 %v595
        %v597 = vperm.slane %v589, %v596
        %v598 = vrot.slane %v581, 4
        %v599 = vsel %vm327, %v598, %v577
        %v600 = vrot.slane %v577, 4
        %v601 = vsel %vm327, %v581, %v600
        %v603 = vunpack.c.l.s4 1983009808
        %v604 = vunpack.c.0.s8 %v603
        %v605 = vperm.slane %v599, %v604
        %v607 = vunpack.c.l.s4 1983009808
        %v608 = vunpack.c.0.s8 %v607
        %v609 = vperm.slane %v601, %v608
        %v610 = vrot.slane %v605, 4
        %v611 = vsel %vm327, %v610, %v593
        %v612 = vrot.slane %v593, 4
        %v613 = vsel %vm327, %v605, %v612
        %v615 = vunpack.c.l.s4 1934713408
        %v616 = vunpack.c.0.s8 %v615
        %v617 = vperm.slane %v611, %v616
        %v619 = vunpack.c.l.s4 1934713408
        %v620 = vunpack.c.0.s8 %v619
        %v621 = vperm.slane %v613, %v620
        %v622 = vrot.slane %v609, 4
        %v623 = vsel %vm327, %v622, %v597
        %v624 = vrot.slane %v597, 4
        %v625 = vsel %vm327, %v609, %v624
        %v627 = vunpack.c.l.s4 1934713408
        %v628 = vunpack.c.0.s8 %v627
        %v629 = vperm.slane %v623, %v628
        %v631 = vunpack.c.l.s4 1934713408
        %v632 = vunpack.c.0.s8 %v631
        %v633 = vperm.slane %v625, %v632
        %v634 = vrot.slane %v617, 4
        %v635 = vsel %vm327, 0.0, %v634
        %v636 = vrot.slane %v621, 4
        %v637 = vsel %vm327, 0.0, %v636
        %v638 = vrot.slane %v629, 4
        %v639 = vsel %vm327, 0.0, %v638
        %v640 = vrot.slane %v633, 4
        %v641 = vsel %vm327, 0.0, %v640
        %v642 = vsel %vm327, %v636, %v617
        %v644 = vunpack.c.l.s4 1983009808
        %v645 = vunpack.c.0.s8 %v644
        %v646 = vperm.slane %v642, %v645
        %v647 = vrot.slane %v637, 4
        %v648 = vsel %vm327, %v647, %v635
        %v650 = vunpack.c.l.s4 1983009808
        %v651 = vunpack.c.0.s8 %v650
        %v652 = vperm.slane %v648, %v651
        %v653 = vsel %vm327, %v640, %v629
        %v655 = vunpack.c.l.s4 1983009808
        %v656 = vunpack.c.0.s8 %v655
        %v657 = vperm.slane %v653, %v656
        %v658 = vrot.slane %v641, 4
        %v659 = vsel %vm327, %v658, %v639
        %v661 = vunpack.c.l.s4 1983009808
        %v662 = vunpack.c.0.s8 %v661
        %v663 = vperm.slane %v659, %v662
        %v664 = vrot.slane %v652, 4
        %v665 = vsel %vm327, %v664, %v646
        %v666 = vrot.slane %v646, 4
        %v667 = vsel %vm327, %v652, %v666
        %v669 = vunpack.c.l.s4 1934713408
        %v670 = vunpack.c.0.s8 %v669
        %v671 = vperm.slane %v665, %v670
        %v673 = vunpack.c.l.s4 1934713408
        %v674 = vunpack.c.0.s8 %v673
        %v675 = vperm.slane %v667, %v674
        %v676 = vrot.slane %v663, 4
        %v677 = vsel %vm327, %v676, %v657
        %v678 = vrot.slane %v657, 4
        %v679 = vsel %vm327, %v663, %v678
        %v681 = vunpack.c.l.s4 1934713408
        %v682 = vunpack.c.0.s8 %v681
        %v683 = vperm.slane %v677, %v682
        %v685 = vunpack.c.l.s4 1934713408
        %v686 = vunpack.c.0.s8 %v685
        %v687 = vperm.slane %v679, %v686
        %v688 = vrot.slane %v683, 4
        %v689 = vsel %vm327, %v688, %v671
        %v690 = vrot.slane %v671, 4
        %v691 = vsel %vm327, %v683, %v690
        %v692 = vrot.slane %v687, 4
        %v693 = vsel %vm327, %v692, %v675
        %v694 = vrot.slane %v675, 4
        %v695 = vsel %vm327, %v687, %v694
        %v696 = vpack.c.bf16 %v689, %v689
        %v697 = vpack.c.bf16 %v691, %v691
        %v698 = vpack.c.bf16 %v693, %v693
        %v699 = vpack.c.bf16 %v695, %v695
        %vm700 = vcmask 64512
        %v702 = vsel %vm700, %v437, 0
        %v705 = vsel %vm700, %v570, 0
        %707 = vmatpush.bf16.xpose.msra.mxu0 0
        %708 = vmatpush.bf16.xpose.msra.mxu0 0
        %709 = vmatpush.bf16.xpose.msra.mxu0 0
        %710 = vmatpush.bf16.xpose.msra.mxu0 0
        %711 = vmatpush.bf16.xpose.msra.mxu0 0
        %712 = vmatpush.bf16.xpose.msra.mxu0 0
        %713 = vmatpush.bf16.xpose.msra.mxu0 0
        %714 = vmatpush.bf16.xpose.msra.mxu0 %v705
        %715 = vmatmul.bf16.gmra.mxu0 %v702
        %v716 = vpop.f32.mrf.mxu0
        %v717 = vadd.f32 0.0, %v716
        %v718 = vpop.f32.mrf.mxu0
        %719 = vdwg.mxu0
        %v721 = vsel %vm700, %v438, 0
        %v724 = vsel %vm700, %v571, 0
        %726 = vmatpush.bf16.xpose.msra.mxu0 0
        %727 = vmatpush.bf16.xpose.msra.mxu0 0
        %728 = vmatpush.bf16.xpose.msra.mxu0 0
        %729 = vmatpush.bf16.xpose.msra.mxu0 0
        %730 = vmatpush.bf16.xpose.msra.mxu0 0
        %731 = vmatpush.bf16.xpose.msra.mxu0 0
        %732 = vmatpush.bf16.xpose.msra.mxu0 0
        %733 = vmatpush.bf16.xpose.msra.mxu0 %v724
        %734 = vmatmul.bf16.gmra.mxu0 %v721
        %v735 = vpop.f32.mrf.mxu0
        %v736 = vadd.f32 0.0, %v735
        %v737 = vpop.f32.mrf.mxu0
        %738 = vdwg.mxu0
        %v740 = vsel %vm700, %v439, 0
        %v743 = vsel %vm700, %v572, 0
        %745 = vmatpush.bf16.xpose.msra.mxu0 0
        %746 = vmatpush.bf16.xpose.msra.mxu0 0
        %747 = vmatpush.bf16.xpose.msra.mxu0 0
        %748 = vmatpush.bf16.xpose.msra.mxu0 0
        %749 = vmatpush.bf16.xpose.msra.mxu0 0
        %750 = vmatpush.bf16.xpose.msra.mxu0 0
        %751 = vmatpush.bf16.xpose.msra.mxu0 0
        %752 = vmatpush.bf16.xpose.msra.mxu0 %v743
        %753 = vmatmul.bf16.gmra.mxu0 %v740
        %v754 = vpop.f32.mrf.mxu0
        %v755 = vadd.f32 0.0, %v754
        %v756 = vpop.f32.mrf.mxu0
        %757 = vdwg.mxu0
        %v759 = vsel %vm700, %v440, 0
        %v762 = vsel %vm700, %v573, 0
        %764 = vmatpush.bf16.xpose.msra.mxu0 0
        %765 = vmatpush.bf16.xpose.msra.mxu0 0
        %766 = vmatpush.bf16.xpose.msra.mxu0 0
        %767 = vmatpush.bf16.xpose.msra.mxu0 0
        %768 = vmatpush.bf16.xpose.msra.mxu0 0
        %769 = vmatpush.bf16.xpose.msra.mxu0 0
        %770 = vmatpush.bf16.xpose.msra.mxu0 0
        %771 = vmatpush.bf16.xpose.msra.mxu0 %v762
        %772 = vmatmul.bf16.gmra.mxu0 %v759
        %v773 = vpop.f32.mrf.mxu0
        %v774 = vadd.f32 0.0, %v773
        %v775 = vpop.f32.mrf.mxu0
        %776 = vdwg.mxu0
        %v777 = vsel %vm700, %v717, -inf
        %778 = vmax.xlane.f32.xlu0 %v777
        %v779 = vpop.xlane.xlu0 %778
        %v780 = vsel %vm700, %v736, -inf
        %781 = vmax.xlane.f32.xlu0 %v780
        %v782 = vpop.xlane.xlu0 %781
        %v783 = vsel %vm700, %v755, -inf
        %784 = vmax.xlane.f32.xlu0 %v783
        %v785 = vpop.xlane.xlu0 %784
        %v786 = vsel %vm700, %v774, -inf
        %787 = vmax.xlane.f32.xlu0 %v786
        %v788 = vpop.xlane.xlu0 %787
        %v789 = vsub.f32 %v717, %v779
        %v790 = vsub.f32 %v736, %v782
        %v791 = vsub.f32 %v755, %v785
        %v792 = vsub.f32 %v774, %v788
        %v793 = vmul.f32 %v789, 1.442695
        %v794 = vpow.pop %v793
        %v795 = vmul.f32 %v790, 1.442695
        %v796 = vpow.pop %v795
        %v797 = vmul.f32 %v791, 1.442695
        %v798 = vpow.pop %v797
        %v799 = vmul.f32 %v792, 1.442695
        %v800 = vpow.pop %v799
        %v801 = vsel %vm700, %v794, 0.0
        %802 = vadd.xlane.f32.xlu0 %v801
        %v803 = vpop.xlane.xlu0 %802
        %v804 = vsel %vm700, %v796, 0.0
        %805 = vadd.xlane.f32.xlu0 %v804
        %v806 = vpop.xlane.xlu0 %805
        %v807 = vsel %vm700, %v798, 0.0
        %808 = vadd.xlane.f32.xlu0 %v807
        %v809 = vpop.xlane.xlu0 %808
        %v810 = vsel %vm700, %v800, 0.0
        %811 = vadd.xlane.f32.xlu0 %v810
        %v812 = vpop.xlane.xlu0 %811
        %v813 = vpack.c.bf16 %v794, %v794
        %v814 = vpack.c.bf16 %v796, %v796
        %v815 = vpack.c.bf16 %v798, %v798
        %v816 = vpack.c.bf16 %v800, %v800
        %v818 = vsel %vm700, %v813, 0
        %vm820 = vcmask 1043456
        %v822 = vsel %vm820, %v696, 0
        %824 = vmatpush.bf16.msra.mxu0 0
        %825 = vmatpush.bf16.msra.mxu0 0
        %826 = vmatpush.bf16.msra.mxu0 0
        %827 = vmatpush.bf16.msra.mxu0 0
        %828 = vmatpush.bf16.msra.mxu0 0
        %829 = vmatpush.bf16.msra.mxu0 0
        %830 = vmatpush.bf16.msra.mxu0 0
        %831 = vmatpush.bf16.msra.mxu0 %v822
        %832 = vmatmul.bf16.gmra.mxu0 %v818
        %v833 = vpop.f32.mrf.mxu0
        %v834 = vadd.f32 0.0, %v833
        %v835 = vpop.f32.mrf.mxu0
        %836 = vdwg.mxu0
        %v838 = vsel %vm700, %v814, 0
        %v841 = vsel %vm820, %v697, 0
        %843 = vmatpush.bf16.msra.mxu0 0
        %844 = vmatpush.bf16.msra.mxu0 0
        %845 = vmatpush.bf16.msra.mxu0 0
        %846 = vmatpush.bf16.msra.mxu0 0
        %847 = vmatpush.bf16.msra.mxu0 0
        %848 = vmatpush.bf16.msra.mxu0 0
        %849 = vmatpush.bf16.msra.mxu0 0
        %850 = vmatpush.bf16.msra.mxu0 %v841
        %851 = vmatmul.bf16.gmra.mxu0 %v838
        %v852 = vpop.f32.mrf.mxu0
        %v853 = vadd.f32 0.0, %v852
        %v854 = vpop.f32.mrf.mxu0
        %855 = vdwg.mxu0
        %v857 = vsel %vm700, %v815, 0
        %v860 = vsel %vm820, %v698, 0
        %862 = vmatpush.bf16.msra.mxu0 0
        %863 = vmatpush.bf16.msra.mxu0 0
        %864 = vmatpush.bf16.msra.mxu0 0
        %865 = vmatpush.bf16.msra.mxu0 0
        %866 = vmatpush.bf16.msra.mxu0 0
        %867 = vmatpush.bf16.msra.mxu0 0
        %868 = vmatpush.bf16.msra.mxu0 0
        %869 = vmatpush.bf16.msra.mxu0 %v860
        %870 = vmatmul.bf16.gmra.mxu0 %v857
        %v871 = vpop.f32.mrf.mxu0
        %v872 = vadd.f32 0.0, %v871
        %v873 = vpop.f32.mrf.mxu0
        %874 = vdwg.mxu0
        %v876 = vsel %vm700, %v816, 0
        %v879 = vsel %vm820, %v699, 0
        %881 = vmatpush.bf16.msra.mxu0 0
        %882 = vmatpush.bf16.msra.mxu0 0
        %883 = vmatpush.bf16.msra.mxu0 0
        %884 = vmatpush.bf16.msra.mxu0 0
        %885 = vmatpush.bf16.msra.mxu0 0
        %886 = vmatpush.bf16.msra.mxu0 0
        %887 = vmatpush.bf16.msra.mxu0 0
        %888 = vmatpush.bf16.msra.mxu0 %v879
        %889 = vmatmul.bf16.gmra.mxu0 %v876
        %v890 = vpop.f32.mrf.mxu0
        %v891 = vadd.f32 0.0, %v890
        %v892 = vpop.f32.mrf.mxu0
        %893 = vdwg.mxu0
        %v894 = vrcp.pop %v803
        %v895 = vrcp.pop %v806
        %v896 = vrcp.pop %v809
        %v897 = vrcp.pop %v812
        %v898 = vmul.f32 %v834, %v894
        %v899 = vmul.f32 %v853, %v895
        %v900 = vmul.f32 %v872, %v896
        %v901 = vmul.f32 %v891, %v897
        %v902 = vrot.slane %v900, 4
        %v903 = vsel %vm327, %v902, %v898
        %v904 = vrot.slane %v898, 4
        %v905 = vsel %vm327, %v900, %v904
        %v907 = vunpack.c.l.s4 1983009808
        %v908 = vunpack.c.0.s8 %v907
        %v909 = vperm.slane %v903, %v908
        %v911 = vunpack.c.l.s4 1983009808
        %v912 = vunpack.c.0.s8 %v911
        %v913 = vperm.slane %v905, %v912
        %v914 = vrot.slane %v901, 4
        %v915 = vsel %vm327, %v914, %v899
        %v916 = vrot.slane %v899, 4
        %v917 = vsel %vm327, %v901, %v916
        %v919 = vunpack.c.l.s4 1983009808
        %v920 = vunpack.c.0.s8 %v919
        %v921 = vperm.slane %v915, %v920
        %v923 = vunpack.c.l.s4 1983009808
        %v924 = vunpack.c.0.s8 %v923
        %v925 = vperm.slane %v917, %v924
        %v926 = vrot.slane %v921, 4
        %v927 = vsel %vm327, %v926, %v909
        %v928 = vrot.slane %v909, 4
        %v929 = vsel %vm327, %v921, %v928
        %v931 = vunpack.c.l.s4 1934713408
        %v932 = vunpack.c.0.s8 %v931
        %v933 = vperm.slane %v927, %v932
        %v935 = vunpack.c.l.s4 1934713408
        %v936 = vunpack.c.0.s8 %v935
        %v937 = vperm.slane %v929, %v936
        %v938 = vrot.slane %v925, 4
        %v939 = vsel %vm327, %v938, %v913
        %v940 = vrot.slane %v913, 4
        %v941 = vsel %vm327, %v925, %v940
        %v943 = vunpack.c.l.s4 1934713408
        %v944 = vunpack.c.0.s8 %v943
        %v945 = vperm.slane %v939, %v944
        %v947 = vunpack.c.l.s4 1934713408
        %v948 = vunpack.c.0.s8 %v947
        %v949 = vperm.slane %v941, %v948
        %v950 = vrot.slane %v933, 4
        %v951 = vsel %vm327, 0.0, %v950
        %v952 = vrot.slane %v937, 4
        %v953 = vsel %vm327, 0.0, %v952
        %v954 = vrot.slane %v945, 4
        %v955 = vsel %vm327, 0.0, %v954
        %v956 = vrot.slane %v949, 4
        %v957 = vsel %vm327, 0.0, %v956
        %v958 = vsel %vm327, %v952, %v933
        %v960 = vunpack.c.l.s4 1983009808
        %v961 = vunpack.c.0.s8 %v960
        %v962 = vperm.slane %v958, %v961
        %v963 = vrot.slane %v953, 4
        %v964 = vsel %vm327, %v963, %v951
        %v966 = vunpack.c.l.s4 1983009808
        %v967 = vunpack.c.0.s8 %v966
        %v968 = vperm.slane %v964, %v967
        %v969 = vsel %vm327, %v956, %v945
        %v971 = vunpack.c.l.s4 1983009808
        %v972 = vunpack.c.0.s8 %v971
        %v973 = vperm.slane %v969, %v972
        %v974 = vrot.slane %v957, 4
        %v975 = vsel %vm327, %v974, %v955
        %v977 = vunpack.c.l.s4 1983009808
        %v978 = vunpack.c.0.s8 %v977
        %v979 = vperm.slane %v975, %v978
        %v980 = vrot.slane %v968, 4
        %v981 = vsel %vm327, %v980, %v962
        %v982 = vrot.slane %v962, 4
        %v983 = vsel %vm327, %v968, %v982
        %v985 = vunpack.c.l.s4 1934713408
        %v986 = vunpack.c.0.s8 %v985
        %v987 = vperm.slane %v981, %v986
        %v989 = vunpack.c.l.s4 1934713408
        %v990 = vunpack.c.0.s8 %v989
        %v991 = vperm.slane %v983, %v990
        %v992 = vrot.slane %v979, 4
        %v993 = vsel %vm327, %v992, %v973
        %v994 = vrot.slane %v973, 4
        %v995 = vsel %vm327, %v979, %v994
        %v997 = vunpack.c.l.s4 1934713408
        %v998 = vunpack.c.0.s8 %v997
        %v999 = vperm.slane %v993, %v998
        %v1001 = vunpack.c.l.s4 1934713408
        %v1002 = vunpack.c.0.s8 %v1001
        %v1003 = vperm.slane %v995, %v1002
        %v1004 = vrot.slane %v999, 4
        %v1005 = vsel %vm327, %v1004, %v987
        %v1006 = vrot.slane %v987, 4
        %v1007 = vsel %vm327, %v999, %v1006
        %v1008 = vrot.slane %v1003, 4
        %v1009 = vsel %vm327, %v1008, %v991
        %v1010 = vrot.slane %v991, 4
        %v1011 = vsel %vm327, %v1003, %v1010
        %1013 = vrot.lane.b32.xlu0 %v1007, 8
        %v1014 = vpop.permute.xlu0 %1013
        %1017 = vrot.lane.b32.xlu0 %v1009, 16
        %v1018 = vpop.permute.xlu0 %1017
        %1021 = vrot.lane.b32.xlu0 %v1011, 24
        %v1022 = vpop.permute.xlu0 %1021
        %v1024 = vsel %vm700, %v1005, %v1014
        %vm1025 = vcmask 130048
        %v1026 = vsel %vm1025, %v1024, %v1018
        %vm1027 = vcmask 195584
        %v1028 = vsel %vm1027, %v1026, %v1022
        %v1029 = vpack.c.bf16 %v1028, %v1028
        %v1030 = vld [vmem:[#allocation7] sm:$0xf]
        %v1031 = vld [vmem:[#allocation7 + $0x4] sm:$0xf]
        %v1032 = vld [vmem:[#allocation7 + $0x8] sm:$0xf]
        %v1033 = vld [vmem:[#allocation7 + $0xc] sm:$0xf]
        %v1034 = vld [vmem:[%s4] sm:$0x1]
        %v1036 = vperm.slane %v1034, 0
        %v1042 = vunpack.c.l.b16 %v1030
        %v1043 = vunpack.c.l.b16 %v1031
        %v1044 = vunpack.c.l.b16 %v1032
        %v1045 = vunpack.c.l.b16 %v1033
        %v1046 = vpack.c.b16 %v1043, %v1042
        %v1047 = vpack.c.b16 %v1045, %v1044
        %v1051 = vsel %vm298, %v1029, 0
        %1053 = vmatpush.bf16.msra.mxu0 0
        %1054 = vmatpush.bf16.msra.mxu0 0
        %1055 = vmatpush.bf16.msra.mxu0 0
        %1056 = vmatpush.bf16.msra.mxu0 0
        %1057 = vmatpush.bf16.msra.mxu0 0
        %1058 = vmatpush.bf16.msra.mxu0 0
        %1059 = vmatpush.bf16.msra.mxu0 %v1047
        %1060 = vmatpush.bf16.msra.mxu0 %v1046
        %1061 = vmatmul.bf16.gmra.mxu0 %v1051
        %v1062 = vpop.f32.mrf.mxu0
        %v1063 = vadd.f32 %v1036, %v1062
        %v1064 = vpop.f32.mrf.mxu0
        %1065 = vdwg.mxu0
        %1066 = vst.msk [vmem:[%s274] sm:$0xff] %vm298, %v1063
        %s1067 = sand.u32 %s141, 1
        %s1068 = scalar_lea.sflag [#allocation4], %s1067
        %s1069 = sand.u32 %s141, 1
        %s1070 = smul.addr %s1069, 8
        %s1071 = scalar_lea.vmem [#allocation8], %s1070
        // Predicated region
        $region53: #{tpu_custom_call.1} parent=39 // pred_check
          %p1072 = pneg %p151
        $region54: #{tpu_custom_call.1} parent=39 // pred_check_branch
          %1074 = sbr.rel (%p1072) target = $region56
        $region55: #{tpu_custom_call.1} parent=39 // pred_region
          %1076 = vsyncadd %s1068, 0
          %s1077 = smul.addr %s23, 8
          %s1078 = scalar_lea.hbm %s5, %s1077
          %s1080 = sshll.u32 %s1071, 4
          %s1081 = int_to_ptr.vmem [resolvable:$true] %s1080
          %s1082 = sshll.u32 %s1078, 4
          %s1083 = int_to_ptr.hbm [resolvable:$true] %s1082
          %1085 = dma.vmem_to_hbm [thread:$0]  %s1081, 128, %s1083, %s1068
        $region56: #{tpu_custom_call.1} parent=39 // pred_fallthru
          _
      $region40: #{tpu_custom_call.1} parent=5 // pred_fallthru
        _
      %p1086 = scmp.le.s32.totalorder 2, %s18
      // Predicated region
      $region57: #{tpu_custom_call.1} parent=5 // pred_check
        %p1087 = pneg %p1086
      $region58: #{tpu_custom_call.1} parent=5 // pred_check_branch
        %1089 = sbr.rel (%p1087) target = $region60
      $region59: #{tpu_custom_call.1} parent=5 // pred_region
        %s1090 = ssub.s32 %s18, 2
        // Predicated region
        $region61: #{tpu_custom_call.1} parent=59 // pred_check
          %p1091 = pneg %p157
        $region62: #{tpu_custom_call.1} parent=59 // pred_check_branch
          %1093 = sbr.rel (%p1091) target = $region64
        $region63: #{tpu_custom_call.1} parent=59 // pred_region
          %s1094 = sand.u32 %s142, 1
          %s1095 = scalar_lea.sflag [#allocation4], %s1094
          %s1096 = sand.u32 %s142, 1
          %s1097 = smul.addr %s1096, 8
          %s1098 = scalar_lea.vmem [#allocation8], %s1097
          %1100 = dma.done %s1095, 128
        $region64: #{tpu_custom_call.1} parent=59 // pred_fallthru
          _
      $region60: #{tpu_custom_call.1} parent=5 // pred_fallthru
        _
    $region6: #{tpu_custom_call.1} parent=1 // loop_footer
      %s22 = sadd.s32 1, %s18
    $region7: #{tpu_custom_call.1} parent=1 // loop_footer_branch
      %17 = sbr.rel target = $region3
    $region8: #{tpu_custom_call.1} parent=1 // loop_exit
      _
    %1101 = vsyncpa [#allocation3], 1
    %s1102 = scalar_lea.sflag [#allocation3], 1
    %1103 = vsyncpa %s1102, 1
    %1104 = vsyncpa [#allocation6], 1
    %1105 = vsyncpa [#allocation4], 1
    %s1106 = scalar_lea.sflag [#allocation4], 1
    %1107 = vsyncpa %s1106, 1

</llo_original>
